<compile_context>
chip_gen: v5e
topology: v5e:2x2
jax: 0.10.0
libtpu: 0.0.40
codegen_flags: <defaults>
</compile_context>

<pallas_src>
import math
from functools import partial

import jax
import jax.numpy as jnp
import numpy as np
from jax import lax
from jax.experimental import pallas as pl
from jax.experimental.pallas import tpu as pltpu

EPS = 1e-8
LEAKY_SLOPE = 0.01  # nn.LeakyReLU default


# ----------------------------------------------------------------------------
# Fused super-block kernel
# ----------------------------------------------------------------------------
def _superblock_kernel(x_ref, w_ref, b_ref, o_ref, act_ref, *, H, W, C):
    """One (batch n, layer l) grid step.

    x_ref  : (1, H, W*C)            lane-dense input image, DMA'd once per n
    w_ref  : (1, 3, (W+2)*C, W*C)   banded block-Toeplitz weights for layer l
    b_ref  : (1, 1, W*C)            bias, pre-tiled along W (lane-dense)
    o_ref  : (1, H, W*C)            output, written only at the last layer
    act_ref: (H+2, (W+2)*C) f32     resident zero-padded activation (halo rows
                                    0 / H+1 and halo lanes [W*C, (W+2)*C) stay 0)
    """
    l = pl.program_id(1)
    WC = W * C

    @pl.when(l == 0)
    def _init():
        act_ref[...] = jnp.zeros_like(act_ref)
        act_ref[1:H + 1, 0:WC] = x_ref[0].astype(jnp.float32)

    s_all = act_ref[...]             # (H+2, (W+2)*C) padded activation
    row0 = s_all[0:H, :]             # tap rows kh = 0, 1, 2
    row1 = s_all[1:H + 1, :]
    row2 = s_all[2:H + 2, :]

    # 3x3 conv as three banded matmuls: K = (W+2)*C, N = W*C (lane-dense out).
    acc = jnp.dot(row0, w_ref[0, 0], preferred_element_type=jnp.float32)
    acc = acc + jnp.dot(row1, w_ref[0, 1], preferred_element_type=jnp.float32)
    acc = acc + jnp.dot(row2, w_ref[0, 2], preferred_element_type=jnp.float32)
    acc = acc + b_ref[0]                                  # bias (1, W*C)
    act = jnp.where(acc >= 0, acc, LEAKY_SLOPE * acc)     # LeakyReLU
    y = act + row1[:, 0:WC]                               # residual add

    act_ref[1:H + 1, 0:WC] = y                            # stays resident in VMEM

    @pl.when(l == pl.num_programs(1) - 1)
    def _store():
        o_ref[0] = y.astype(o_ref.dtype)


def _build_banded_weights(weight, W):
    """(L, O, I, 3, 3) conv weights -> banded matrices (L, 3, (W+2)*C, W*C).

    B[l, kh, s*C + i, w_out*C + o] = weight[l, o, i, kh, s + 1 - w_out]
    when s + 1 - w_out in {0,1,2}, else 0.  Storage column block s holds the
    unpadded x column s; blocks s in {W, W+1} multiply the always-zero halo
    lanes, so the left/right zero padding of the conv falls out automatically.
    """
    L, O, I, KH, KW = weight.shape
    C = I
    wk = jnp.transpose(weight, (0, 3, 4, 2, 1))       # (L, kh, kw, I, O)
    s = jnp.arange(W + 2)[:, None]                    # storage column block
    wo = jnp.arange(W)[None, :]                       # output column block
    kw_idx = s + 1 - wo                               # (W+2, W)
    valid = ((kw_idx >= 0) & (kw_idx <= 2)).astype(weight.dtype)
    kw_c = jnp.clip(kw_idx, 0, 2)
    band = wk[:, :, kw_c, :, :]                       # (L, 3, W+2, W, I, O)
    band = band * valid[None, None, :, :, None, None]
    band = jnp.transpose(band, (0, 1, 2, 4, 3, 5))    # (L, 3, W+2, I, W, O)
    return band.reshape(L, 3, (W + 2) * C, W * C)


def fused_superblock_forward(x, weight, bias):
    """x: (N, H, W, C) NHWC.  weight: (L, O, I, 3, 3) with O == I == C.  bias: (L, O)."""
    N, H, W, C = x.shape
    L, O, I = weight.shape[0], weight.shape[1], weight.shape[2]
    assert O == I == C, "kernel assumes Cin == Cout == n_channels"
    WC = W * C

    w_band = _build_banded_weights(weight.astype(jnp.float32), W)   # (L, 3, (W+2)*C, W*C)
    b_tiled = jnp.tile(bias.astype(jnp.float32), (1, W)).reshape(L, 1, WC)
    x2 = x.reshape(N, H, WC)                                        # lane-dense view (free)

    kernel = partial(_superblock_kernel, H=H, W=W, C=C)
    out = pl.pallas_call(
        kernel,
        out_shape=jax.ShapeDtypeStruct((N, H, WC), x.dtype),
        grid=(N, L),
        in_specs=[
            pl.BlockSpec((1, H, WC), lambda n, l: (n, 0, 0)),              # fetched once per n
            pl.BlockSpec((1, 3, (W + 2) * C, WC), lambda n, l: (l, 0, 0, 0)),
            pl.BlockSpec((1, 1, WC), lambda n, l: (l, 0, 0)),
        ],
        out_specs=pl.BlockSpec((1, H, WC), lambda n, l: (n, 0, 0)),        # flushed once per n
        scratch_shapes=[pltpu.VMEM((H + 2, (W + 2) * C), jnp.float32)],
        compiler_params=pltpu.CompilerParams(
            dimension_semantics=("parallel", "arbitrary")),
    )(x2, w_band, b_tiled)
    return out.reshape(N, H, W, C)


# ----------------------------------------------------------------------------
# Parameter init + batched sampling + forward (glue in plain JAX)
# ----------------------------------------------------------------------------
def init_superblock_params(key, n_channels, truncation_level, posterior_std):
    """Re-implementation of initialize_posterior_params, stacked over layers."""
    rho = math.log(math.exp(posterior_std) - 1.0)  # softplus^-1(posterior_std)
    C = n_channels
    q_w_mu = jax.random.uniform(key, (truncation_level, C, C, 3, 3), jnp.float32, -0.2, 0.2)
    q_w_sig = jnp.full((truncation_level, C, C, 3, 3), rho, jnp.float32)
    q_b_mu = jnp.zeros((truncation_level, C), jnp.float32)
    q_b_sig = jnp.full((truncation_level, C), rho, jnp.float32)
    return q_w_mu, q_w_sig, q_b_mu, q_b_sig


def sample_all_weights(key, q_w_mu, q_w_sig, q_b_mu, q_b_sig):
    """Reparameterized sampling for ALL layers in one vectorized step."""
    kw, kb = jax.random.split(key)
    w = q_w_mu + (jax.nn.softplus(q_w_sig) + EPS) * jax.random.normal(kw, q_w_mu.shape, jnp.float32)
    b = q_b_mu + (jax.nn.softplus(q_b_sig) + EPS) * jax.random.normal(kb, q_b_mu.shape, jnp.float32)
    return w, b


@partial(jax.jit, static_argnames=("threshold",))
def np_bayes_conv_superblock_forward(x, params, mask_matrix, sample_key, *, threshold):
    """x: (N,H,W,C).  mask_matrix: (truncation_level, O, I) neuron mask."""
    q_w_mu, q_w_sig, q_b_mu, q_b_sig = params
    assert 1 <= threshold <= q_w_mu.shape[0]
    w_all, b_all = sample_all_weights(
        sample_key, q_w_mu[:threshold], q_w_sig[:threshold],
        q_b_mu[:threshold], q_b_sig[:threshold])
    w_all = w_all * mask_matrix[:threshold][:, :, :, None, None]   # (O,I) mask broadcast
    return fused_superblock_forward(x, w_all, b_all)


# ----------------------------------------------------------------------------
# Pure-JAX reference (correctness check; same sampling procedure)
# ----------------------------------------------------------------------------
def _ref_forward(x, params, mask_matrix, threshold, sample_key):
    q_w_mu, q_w_sig, q_b_mu, q_b_sig = params
    w_all, b_all = sample_all_weights(
        sample_key, q_w_mu[:threshold], q_w_sig[:threshold],
        q_b_mu[:threshold], q_b_sig[:threshold])
    w_all = w_all * mask_matrix[:threshold][:, :, :, None, None]
    for i in range(threshold):
        w_hwio = jnp.transpose(w_all[i], (2, 3, 1, 0))
        y = lax.conv_general_dilated(
            x, w_hwio, window_strides=(1, 1), padding="SAME",
            dimension_numbers=("NHWC", "HWIO", "NHWC"),
            precision=lax.Precision.HIGHEST)
        y = y + b_all[i][None, None, None, :]
        y = jnp.where(y >= 0, y, LEAKY_SLOPE * y)
        x = y + x
    return x


if __name__ == "__main__":
    # Small shapes consistent with the module: batch=2, n_channels=8, 16x16.
    # W*C = 128 -> fully lane-dense kernel layout.
    N, C, H, W = 2, 8, 16, 16
    truncation_level = 3
    threshold = 2
    posterior_std = 0.001

    root = jax.random.PRNGKey(0)
    k_x, k_params, k_mask, k_sample = jax.random.split(root, 4)

    x = jax.random.normal(k_x, (N, H, W, C), jnp.float32)  # layout: NHWC
    params = init_superblock_params(k_params, C, truncation_level, posterior_std)
    mask_matrix = jax.random.bernoulli(
        k_mask, 0.7, (truncation_level, C, C)).astype(jnp.float32)

    out = np_bayes_conv_superblock_forward(
        x, params, mask_matrix, k_sample, threshold=threshold)
    out = jax.block_until_ready(out)

    ref = _ref_forward(x, params, mask_matrix, threshold, k_sample)
    # Tolerance covers possible MXU bf16-pass rounding of the in-kernel f32
    # matmuls vs. the HIGHEST-precision XLA conv reference; structural errors
    # would be O(1) and still caught.
    np.testing.assert_allclose(np.asarray(out), np.asarray(ref), atol=1e-2, rtol=1e-2)

    print("KERNEL_OK")
</pallas_src>

<mosaic_0001>
module attributes {stable_mosaic.version = 11 : i64} {
  func.func @_superblock_kernel(%arg0: i32, %arg1: i32, %arg2: memref<1x16x128xf32, #tpu.memory_space<vmem>>, %arg3: memref<1x3x144x128xf32, #tpu.memory_space<vmem>>, %arg4: memref<1x1x128xf32, #tpu.memory_space<vmem>>, %arg5: memref<1x16x128xf32, #tpu.memory_space<vmem>>, %arg6: memref<18x144xf32, #tpu.memory_space<vmem>>) attributes {dimension_semantics = [#tpu.dimension_semantics<parallel>, #tpu.dimension_semantics<arbitrary>], iteration_bounds = array<i64: 2, 2>, scalar_prefetch = 0 : i64, scratch_operands = 1 : i64, tpu.core_type = #tpu.core_type<tc>, window_params = [{transform_indices = @transform_0, window_bounds = array<i64: 1, 16, 128>}, {transform_indices = @transform_1, window_bounds = array<i64: 1, 3, 144, 128>}, {transform_indices = @transform_2, window_bounds = array<i64: 1, 1, 128>}, {transform_indices = @transform_3, window_bounds = array<i64: 1, 16, 128>}]} {
    %c0_i32 = arith.constant 0 : i32
    %0 = arith.cmpi eq, %arg1, %c0_i32 : i32
    %1 = arith.extui %0 : i1 to i32
    %c0_i32_0 = arith.constant 0 : i32
    %2 = arith.cmpi ne, %1, %c0_i32_0 : i32
    scf.if %2 {
      %cst_22 = arith.constant 0.000000e+00 : f32
      %33 = vector.broadcast %cst_22 : f32 to vector<18x144xf32>
      %c0_23 = arith.constant 0 : index
      %c0_24 = arith.constant 0 : index
      %34 = vector.load %arg6[%c0_23, %c0_24] : memref<18x144xf32, #tpu.memory_space<vmem>>, vector<18x144xf32>
      tpu.vector_store %arg6[%c0_23, %c0_24], %33 {strides = array<i32>} : memref<18x144xf32, #tpu.memory_space<vmem>>, vector<18x144xf32>,
      %c0_25 = arith.constant 0 : index
      %c0_26 = arith.constant 0 : index
      %c0_27 = arith.constant 0 : index
      %35 = vector.load %arg2[%c0_25, %c0_26, %c0_27] : memref<1x16x128xf32, #tpu.memory_space<vmem>>, vector<1x16x128xf32>
      %36 = vector.shape_cast %35 : vector<1x16x128xf32> to vector<16x128xf32>
      %c1_28 = arith.constant 1 : index
      %c0_29 = arith.constant 0 : index
      %37 = vector.load %arg6[%c1_28, %c0_29] : memref<18x144xf32, #tpu.memory_space<vmem>>, vector<16x128xf32>
      tpu.vector_store %arg6[%c1_28, %c0_29], %36 {strides = array<i32>} : memref<18x144xf32, #tpu.memory_space<vmem>>, vector<16x128xf32>,
    } else {
    }
    %c0 = arith.constant 0 : index
    %c0_1 = arith.constant 0 : index
    %3 = vector.load %arg6[%c0, %c0_1] : memref<18x144xf32, #tpu.memory_space<vmem>>, vector<18x144xf32>
    %4 = vector.extract_strided_slice %3 {offsets = [0, 0], sizes = [16, 144], strides = [1, 1]} : vector<18x144xf32> to vector<16x144xf32>
    %5 = vector.extract_strided_slice %3 {offsets = [1, 0], sizes = [16, 144], strides = [1, 1]} : vector<18x144xf32> to vector<16x144xf32>
    %6 = vector.extract_strided_slice %3 {offsets = [2, 0], sizes = [16, 144], strides = [1, 1]} : vector<18x144xf32> to vector<16x144xf32>
    %c0_2 = arith.constant 0 : index
    %c0_3 = arith.constant 0 : index
    %c0_4 = arith.constant 0 : index
    %c0_5 = arith.constant 0 : index
    %7 = vector.load %arg3[%c0_2, %c0_3, %c0_4, %c0_5] : memref<1x3x144x128xf32, #tpu.memory_space<vmem>>, vector<1x1x144x128xf32>
    %8 = vector.shape_cast %7 : vector<1x1x144x128xf32> to vector<144x128xf32>
    %cst = arith.constant dense<0.000000e+00> : vector<16x128xf32>
    %9 = tpu.matmul %4, %8, %cst {dimension_numbers = #tpu.dot_dimension_numbers<[1], [0], [0], [1], [0, 0, 1, 1], [], []>} : vector<16x144xf32>, vector<144x128xf32>, vector<16x128xf32> -> vector<16x128xf32>
    %c0_6 = arith.constant 0 : index
    %c1 = arith.constant 1 : index
    %c0_7 = arith.constant 0 : index
    %c0_8 = arith.constant 0 : index
    %10 = vector.load %arg3[%c0_6, %c1, %c0_7, %c0_8] : memref<1x3x144x128xf32, #tpu.memory_space<vmem>>, vector<1x1x144x128xf32>
    %11 = vector.shape_cast %10 : vector<1x1x144x128xf32> to vector<144x128xf32>
    %cst_9 = arith.constant dense<0.000000e+00> : vector<16x128xf32>
    %12 = tpu.matmul %5, %11, %cst_9 {dimension_numbers = #tpu.dot_dimension_numbers<[1], [0], [0], [1], [0, 0, 1, 1], [], []>} : vector<16x144xf32>, vector<144x128xf32>, vector<16x128xf32> -> vector<16x128xf32>
    %13 = arith.addf %9, %12 : vector<16x128xf32>
    %c0_10 = arith.constant 0 : index
    %c2 = arith.constant 2 : index
    %c0_11 = arith.constant 0 : index
    %c0_12 = arith.constant 0 : index
    %14 = vector.load %arg3[%c0_10, %c2, %c0_11, %c0_12] : memref<1x3x144x128xf32, #tpu.memory_space<vmem>>, vector<1x1x144x128xf32>
    %15 = vector.shape_cast %14 : vector<1x1x144x128xf32> to vector<144x128xf32>
    %cst_13 = arith.constant dense<0.000000e+00> : vector<16x128xf32>
    %16 = tpu.matmul %6, %15, %cst_13 {dimension_numbers = #tpu.dot_dimension_numbers<[1], [0], [0], [1], [0, 0, 1, 1], [], []>} : vector<16x144xf32>, vector<144x128xf32>, vector<16x128xf32> -> vector<16x128xf32>
    %17 = arith.addf %13, %16 : vector<16x128xf32>
    %c0_14 = arith.constant 0 : index
    %c0_15 = arith.constant 0 : index
    %c0_16 = arith.constant 0 : index
    %18 = vector.load %arg4[%c0_14, %c0_15, %c0_16] : memref<1x1x128xf32, #tpu.memory_space<vmem>>, vector<1x1x128xf32>
    %19 = vector.shape_cast %18 : vector<1x1x128xf32> to vector<1x128xf32>
    %20 = vector.broadcast %19 : vector<1x128xf32> to vector<16x128xf32>
    %21 = arith.addf %17, %20 : vector<16x128xf32>
    %cst_17 = arith.constant 0.000000e+00 : f32
    %22 = vector.broadcast %cst_17 : f32 to vector<16x128xf32>
    %23 = arith.cmpf oge, %21, %22 : vector<16x128xf32>
    %cst_18 = arith.constant 0.00999999977 : f32
    %24 = vector.broadcast %cst_18 : f32 to vector<16x128xf32>
    %25 = arith.mulf %24, %21 : vector<16x128xf32>
    %26 = arith.select %23, %21, %25 : vector<16x128xi1>, vector<16x128xf32>
    %27 = vector.extract_strided_slice %5 {offsets = [0, 0], sizes = [16, 128], strides = [1, 1]} : vector<16x144xf32> to vector<16x128xf32>
    %28 = arith.addf %26, %27 : vector<16x128xf32>
    %c1_19 = arith.constant 1 : index
    %c0_20 = arith.constant 0 : index
    %29 = vector.load %arg6[%c1_19, %c0_20] : memref<18x144xf32, #tpu.memory_space<vmem>>, vector<16x128xf32>
    tpu.vector_store %arg6[%c1_19, %c0_20], %28 {strides = array<i32>} : memref<18x144xf32, #tpu.memory_space<vmem>>, vector<16x128xf32>,
    %c1_i32 = arith.constant 1 : i32
    %30 = arith.cmpi eq, %arg1, %c1_i32 : i32
    %31 = arith.extui %30 : i1 to i32
    %c0_i32_21 = arith.constant 0 : i32
    %32 = arith.cmpi ne, %31, %c0_i32_21 : i32
    scf.if %32 {
      %c0_22 = arith.constant 0 : index
      %c0_23 = arith.constant 0 : index
      %c0_24 = arith.constant 0 : index
      %33 = vector.load %arg5[%c0_22, %c0_23, %c0_24] : memref<1x16x128xf32, #tpu.memory_space<vmem>>, vector<1x16x128xf32>
      %34 = vector.shape_cast %33 : vector<1x16x128xf32> to vector<16x128xf32>
      %35 = vector.shape_cast %28 : vector<16x128xf32> to vector<1x16x128xf32>
      tpu.vector_store %arg5[%c0_22, %c0_23, %c0_24], %35 {strides = array<i32>} : memref<1x16x128xf32, #tpu.memory_space<vmem>>, vector<1x16x128xf32>,
    } else {
    }
    return
  }
  func.func @transform_0(%arg0: i32, %arg1: i32) -> (i32, i32, i32) {
    %c0_i32 = arith.constant 0 : i32
    %c0_i32_0 = arith.constant 0 : i32
    %c0_i32_1 = arith.constant 0 : i32
    return %arg0, %c0_i32, %c0_i32_0 : i32, i32, i32
  }
  func.func @transform_1(%arg0: i32, %arg1: i32) -> (i32, i32, i32, i32) {
    %c0_i32 = arith.constant 0 : i32
    %c0_i32_0 = arith.constant 0 : i32
    %c0_i32_1 = arith.constant 0 : i32
    %c0_i32_2 = arith.constant 0 : i32
    return %arg1, %c0_i32, %c0_i32_0, %c0_i32_1 : i32, i32, i32, i32
  }
  func.func @transform_2(%arg0: i32, %arg1: i32) -> (i32, i32, i32) {
    %c0_i32 = arith.constant 0 : i32
    %c0_i32_0 = arith.constant 0 : i32
    %c0_i32_1 = arith.constant 0 : i32
    return %arg1, %c0_i32, %c0_i32_0 : i32, i32, i32
  }
  func.func @transform_3(%arg0: i32, %arg1: i32) -> (i32, i32, i32) {
    %c0_i32 = arith.constant 0 : i32
    %c0_i32_0 = arith.constant 0 : i32
    %c0_i32_1 = arith.constant 0 : i32
    return %arg0, %c0_i32, %c0_i32_0 : i32, i32, i32
  }
}

</mosaic_0001>

<llo_original>
// kernel: np_bayes_conv_superblock_forward.1
$region0: #{np_bayes_conv_superblock_forward.1}
  #allocation0 [shape = 'u32[]', space=smem, size = 0x4, offset = 0x4, fixed_abs, tag = 'smem constant byte address 0x4 - core index']
  #allocation1 [shape = 'u32[72,128]{1,0:T(1,128)}', space=vmem, size = 0x9000, scoped, tag = 'internal scratch']
  #allocation2 [shape = 'f32[18,144]{1,0:T(8,128)}', space=vmem, size = 0x6000, scoped, tag = 'scratch operand']
  %s0 = inlined_call_operand.vmem [shape: f32[2,16,128], index: 0, kind: input, shape index: {}]
  %s1 = inlined_call_operand.vmem [shape: f32[2,3,144,128], index: 1, kind: input, shape index: {}]
  %s2 = inlined_call_operand.vmem [shape: f32[2,1,128], index: 2, kind: input, shape index: {}]
  %s3 = inlined_call_operand.vmem [shape: f32[2,16,128], index: 3, kind: output, shape index: {}]
  %s4 = sld [smem:[#allocation0]]
  $region53: #{np_bayes_conv_superblock_forward.1} parent=0
    _
  %s6 = ssub.s32 1, %s4
  %s7 = scalar_select 0, %s6, %s4
  loop: start=0, step=1, limit=6
  $region2: #{np_bayes_conv_superblock_forward.1} parent=0 // loop_pre_header
    _
  $region3: #{np_bayes_conv_superblock_forward.1} parent=0 // loop_header
    %s9 = sphi 0, %s13
    %p10 = scmp.ge.s32.totalorder %s9, 6
    %s16 = sphi 0, %s28
    %s17 = sphi 0, %s24
    %s18 = sphi 0, %s16
    %s19 = sphi 0, %s17
    %s20 = sphi 0, %s18
    %s21 = sphi 0, %s19
    %s31 = sphi 0, %s33
    %s34 = sphi 0, %s31
    %s35 = sphi 0, %s34
    %s51 = sphi 0, %s35
    %s57 = sphi 0, %s59
    %s60 = sphi 0, %s57
    %s61 = sphi 0, %s60
    %s77 = sphi 0, %s61
    %s83 = sphi 0, %s85
    %s86 = sphi 0, %s83
    %s87 = sphi 0, %s86
    %s103 = sphi 0, %s87
    %s109 = sphi 0, %s111
    %s112 = sphi 0, %s109
    %s113 = sphi 0, %s112
    %s129 = sphi 0, %s113
  $region4: #{np_bayes_conv_superblock_forward.1} parent=0 // loop_header_branch
    %12 = sbr.rel (%p10) target = $region8
  $region5: #{np_bayes_conv_superblock_forward.1} parent=0 // loop_body
    %s14 = ssub.s32 %s9, 1
    %s15 = ssub.s32 %s9, 2
    %s22 = sadd.s32 1, %s17
    %p23 = scmp.ge.s32.totalorder %s22, 2
    %s24 = scalar_select %p23, 0, %s22
    %s25 = sadd.s32 1, %s16
    %s26 = scalar_select %p23, %s25, %s16
    %p27 = scmp.ge.s32.totalorder %s26, 2
    %s28 = scalar_select %p27, 0, %s26
    %s29 = ssub.s32 %s16, %s28
    %p30 = scmp.eq.s32.totalorder %s29, 0
    %s32 = sadd.s32 %s31, 1
    %s33 = scalar_select %p30, %s31, %s32
    %p36 = pneg %p30
    %p37 = scmp.eq.s32.totalorder %s9, 3
    %p38 = por %p36, %p37
    %p39 = scmp.ne.s32.totalorder %s31, %s34
    %p40 = scmp.eq.s32.totalorder %s9, 0
    %p41 = por %p39, %p40
    %p42 = scmp.ne.s32.totalorder %s31, %s34
    %p43 = scmp.eq.s32.totalorder %s14, 3
    %p44 = por %p42, %p43
    %p45 = scmp.ne.s32.totalorder %s34, %s35
    %p46 = scmp.eq.s32.totalorder %s14, 0
    %p47 = por %p45, %p46
    %p48 = scmp.ne.s32.totalorder %s34, %s35
    %p49 = scmp.eq.s32.totalorder %s15, 3
    %p50 = por %p48, %p49
    %p52 = scmp.ne.s32.totalorder %s35, %s51
    %p53 = scmp.eq.s32.totalorder %s15, 0
    %p54 = por %p52, %p53
    %s55 = ssub.s32 %s17, %s24
    %p56 = scmp.eq.s32.totalorder %s55, 0
    %s58 = sadd.s32 %s57, 1
    %s59 = scalar_select %p56, %s57, %s58
    %p62 = pneg %p56
    %p63 = scmp.eq.s32.totalorder %s9, 3
    %p64 = por %p62, %p63
    %p65 = scmp.ne.s32.totalorder %s57, %s60
    %p66 = scmp.eq.s32.totalorder %s9, 0
    %p67 = por %p65, %p66
    %p68 = scmp.ne.s32.totalorder %s57, %s60
    %p69 = scmp.eq.s32.totalorder %s14, 3
    %p70 = por %p68, %p69
    %p71 = scmp.ne.s32.totalorder %s60, %s61
    %p72 = scmp.eq.s32.totalorder %s14, 0
    %p73 = por %p71, %p72
    %p74 = scmp.ne.s32.totalorder %s60, %s61
    %p75 = scmp.eq.s32.totalorder %s15, 3
    %p76 = por %p74, %p75
    %p78 = scmp.ne.s32.totalorder %s61, %s77
    %p79 = scmp.eq.s32.totalorder %s15, 0
    %p80 = por %p78, %p79
    %s81 = ssub.s32 %s17, %s24
    %p82 = scmp.eq.s32.totalorder %s81, 0
    %s84 = sadd.s32 %s83, 1
    %s85 = scalar_select %p82, %s83, %s84
    %p88 = pneg %p82
    %p89 = scmp.eq.s32.totalorder %s9, 3
    %p90 = por %p88, %p89
    %p91 = scmp.ne.s32.totalorder %s83, %s86
    %p92 = scmp.eq.s32.totalorder %s9, 0
    %p93 = por %p91, %p92
    %p94 = scmp.ne.s32.totalorder %s83, %s86
    %p95 = scmp.eq.s32.totalorder %s14, 3
    %p96 = por %p94, %p95
    %p97 = scmp.ne.s32.totalorder %s86, %s87
    %p98 = scmp.eq.s32.totalorder %s14, 0
    %p99 = por %p97, %p98
    %p100 = scmp.ne.s32.totalorder %s86, %s87
    %p101 = scmp.eq.s32.totalorder %s15, 3
    %p102 = por %p100, %p101
    %p104 = scmp.ne.s32.totalorder %s87, %s103
    %p105 = scmp.eq.s32.totalorder %s15, 0
    %p106 = por %p104, %p105
    %s107 = ssub.s32 %s16, %s28
    %p108 = scmp.eq.s32.totalorder %s107, 0
    %s110 = sadd.s32 %s109, 1
    %s111 = scalar_select %p108, %s109, %s110
    %p114 = pneg %p108
    %p115 = scmp.eq.s32.totalorder %s9, 3
    %p116 = por %p114, %p115
    %p117 = scmp.ne.s32.totalorder %s109, %s112
    %p118 = scmp.eq.s32.totalorder %s9, 0
    %p119 = por %p117, %p118
    %p120 = scmp.ne.s32.totalorder %s109, %s112
    %p121 = scmp.eq.s32.totalorder %s14, 3
    %p122 = por %p120, %p121
    %p123 = scmp.ne.s32.totalorder %s112, %s113
    %p124 = scmp.eq.s32.totalorder %s14, 0
    %p125 = por %p123, %p124
    %p126 = scmp.ne.s32.totalorder %s112, %s113
    %p127 = scmp.eq.s32.totalorder %s15, 3
    %p128 = por %p126, %p127
    %p130 = scmp.ne.s32.totalorder %s113, %s129
    %p131 = scmp.eq.s32.totalorder %s15, 0
    %p132 = por %p130, %p131
    %p133 = scmp.le.s32.totalorder 1, %s9
    %p134 = scmp.lt.s32.totalorder %s9, 5
    %p135 = pnand %p133, %p134
    %p136 = pneg %p135
    // Predicated region
    $region9: #{np_bayes_conv_superblock_forward.1} parent=5 // pred_check
      _
    $region10: #{np_bayes_conv_superblock_forward.1} parent=5 // pred_check_branch
      %138 = sbr.rel (%p135) target = $region12
    $region11: #{np_bayes_conv_superblock_forward.1} parent=5 // pred_region
      %s139 = ssub.s32 %s9, 1
    $region12: #{np_bayes_conv_superblock_forward.1} parent=5 // pred_fallthru
      _
    %p140 = scmp.lt.s32.totalorder %s9, 4
    // Predicated region
    $region13: #{np_bayes_conv_superblock_forward.1} parent=5 // pred_check
      %p141 = pneg %p140
    $region14: #{np_bayes_conv_superblock_forward.1} parent=5 // pred_check_branch
      %143 = sbr.rel (%p141) target = $region16
    $region15: #{np_bayes_conv_superblock_forward.1} parent=5 // pred_region
      // Predicated region
      $region17: #{np_bayes_conv_superblock_forward.1} parent=15 // pred_check
        %p144 = pneg %p41
      $region18: #{np_bayes_conv_superblock_forward.1} parent=15 // pred_check_branch
        %146 = sbr.rel (%p144) target = $region20
      $region19: #{np_bayes_conv_superblock_forward.1} parent=15 // pred_region
        %p147 = scmp.lt.s32.totalorder %s16, 1
        %s148 = scalar_select %p147, %s16, 1
        %s149 = smul.addr %s148, 2
        %s150 = smul.addr %s149, 8
        %s151 = scalar_lea.vmem %s0, %s150
      $region20: #{np_bayes_conv_superblock_forward.1} parent=15 // pred_fallthru
        _
      // Predicated region
      $region21: #{np_bayes_conv_superblock_forward.1} parent=15 // pred_check
        %p152 = pneg %p67
      $region22: #{np_bayes_conv_superblock_forward.1} parent=15 // pred_check_branch
        %154 = sbr.rel (%p152) target = $region24
      $region23: #{np_bayes_conv_superblock_forward.1} parent=15 // pred_region
        %p155 = scmp.lt.s32.totalorder %s17, 1
        %s156 = scalar_select %p155, %s17, 1
        %s157 = smul.addr %s156, 54
        %s158 = smul.addr %s157, 8
        %s159 = scalar_lea.vmem %s1, %s158
      $region24: #{np_bayes_conv_superblock_forward.1} parent=15 // pred_fallthru
        _
      // Predicated region
      $region25: #{np_bayes_conv_superblock_forward.1} parent=15 // pred_check
        %p160 = pneg %p93
      $region26: #{np_bayes_conv_superblock_forward.1} parent=15 // pred_check_branch
        %162 = sbr.rel (%p160) target = $region28
      $region27: #{np_bayes_conv_superblock_forward.1} parent=15 // pred_region
        %p163 = scmp.lt.s32.totalorder %s17, 1
        %s164 = scalar_select %p163, %s17, 1
        %s165 = scalar_lea.vmem %s2, %s164
      $region28: #{np_bayes_conv_superblock_forward.1} parent=15 // pred_fallthru
        _
    $region16: #{np_bayes_conv_superblock_forward.1} parent=5 // pred_fallthru
      _
    %p166 = scmp.le.s32.totalorder 1, %s9
    %p167 = scmp.lt.s32.totalorder %s9, 5
    %p168 = pnand %p166, %p167
    %p169 = pneg %p168
    // Predicated region
    $region29: #{np_bayes_conv_superblock_forward.1} parent=5 // pred_check
      _
    $region30: #{np_bayes_conv_superblock_forward.1} parent=5 // pred_check_branch
      %171 = sbr.rel (%p168) target = $region32
    $region31: #{np_bayes_conv_superblock_forward.1} parent=5 // pred_region
      %s172 = ssub.s32 %s9, 1
      %p173 = scmp.lt.s32.totalorder %s18, 1
      %s174 = scalar_select %p173, %s18, 1
      %s175 = smul.addr %s174, 2
      %s176 = smul.addr %s175, 8
      %s177 = scalar_lea.vmem %s0, %s176
      %p178 = pneg %p47
      %p179 = pneg %p44
      %p180 = scmp.lt.s32.totalorder %s19, 1
      %s181 = scalar_select %p180, %s19, 1
      %s182 = smul.addr %s181, 54
      %s183 = smul.addr %s182, 8
      %s184 = scalar_lea.vmem %s1, %s183
      %p185 = pneg %p73
      %p186 = pneg %p70
      %p187 = scmp.lt.s32.totalorder %s19, 1
      %s188 = scalar_select %p187, %s19, 1
      %s189 = scalar_lea.vmem %s2, %s188
      %p190 = pneg %p99
      %p191 = pneg %p96
      %p192 = pneg %p125
      %p193 = pneg %p122
      %p194 = scmp.lt.s32.totalorder %s18, 1
      %s195 = scalar_select %p194, %s18, 1
      %s196 = smul.addr %s195, 2
      %s197 = smul.addr %s196, 8
      %s198 = scalar_lea.vmem %s3, %s197
      %p199 = scmp.lt.s32.totalorder %s18, 1
      %s200 = scalar_select %p199, %s18, 1
      %s201 = smul.addr %s200, 2
      %s202 = smul.addr %s201, 8
      %s203 = scalar_lea.vmem %s0, %s202
      %p204 = scmp.lt.s32.totalorder %s19, 1
      %s205 = scalar_select %p204, %s19, 1
      %s206 = smul.addr %s205, 54
      %s207 = smul.addr %s206, 8
      %s208 = scalar_lea.vmem %s1, %s207
      %p209 = scmp.lt.s32.totalorder %s19, 1
      %s210 = scalar_select %p209, %s19, 1
      %s211 = scalar_lea.vmem %s2, %s210
      %p212 = scmp.lt.s32.totalorder %s18, 1
      %s213 = scalar_select %p212, %s18, 1
      %s214 = smul.addr %s213, 2
      %s215 = smul.addr %s214, 8
      %s216 = scalar_lea.vmem %s3, %s215
      %p217 = scmp.eq.s32.totalorder %s19, 0
      // Predicated region
      $region33: #{np_bayes_conv_superblock_forward.1} parent=31 // pred_check
        %p218 = pneg %p217
      $region34: #{np_bayes_conv_superblock_forward.1} parent=31 // pred_check_branch
        %220 = sbr.rel (%p218) target = $region36
      $region35: #{np_bayes_conv_superblock_forward.1} parent=31 // pred_region
        %221 = vst [vmem:[#allocation2] sm:$0xff] 0.0
        %vm222 = vcmask 130048
        %223 = vst.msk [vmem:[#allocation2 + $0x8] sm:$0xff] %vm222, 0.0
        %224 = vst [vmem:[#allocation2 + $0x10] sm:$0xff] 0.0
        %225 = vst.msk [vmem:[#allocation2 + $0x18] sm:$0xff] %vm222, 0.0
        %226 = vst [vmem:[#allocation2 + $0x20] sm:$0x3] 0.0
        %vm227 = vcmask 123904
        %228 = vst.msk [vmem:[#allocation2 + $0x28] sm:$0x3] %vm227, 0.0
        %v229 = vld [vmem:[%s203] sm:$0xff]
        %v230 = vld [vmem:[%s203 + $0x8] sm:$0xff]
        %vm233 = vcmask 1040384
        %v234 = vrot.slane %v229, 7
        %v235 = vrot.slane %v230, 7
        %v236 = vsel %vm233, %v234, %v235
        %240 = vst [vmem:[#allocation2] sm:$0xfe] %v234
        %241 = vst [vmem:[#allocation2 + $0x10] sm:$0xff] %v236
        %242 = vst [vmem:[#allocation2 + $0x20] sm:$0x1] %v235
      $region36: #{np_bayes_conv_superblock_forward.1} parent=31 // pred_fallthru
        _
      %v243 = vld [vmem:[#allocation2] sm:$0xff]
      %v244 = vld [vmem:[#allocation2 + $0x8] sm:$0xff]
      %v245 = vld [vmem:[#allocation2 + $0x10] sm:$0xff]
      %v246 = vld [vmem:[#allocation2 + $0x18] sm:$0xff]
      %v247 = vld [vmem:[#allocation2 + $0x20] sm:$0x3]
      %v248 = vld [vmem:[#allocation2 + $0x28] sm:$0x3]
      %v249 = vld [vmem:[%s208] sm:$0xff]
      %v250 = vld [vmem:[%s208 + $0x8] sm:$0xff]
      %v251 = vld [vmem:[%s208 + $0x10] sm:$0xff]
      %v252 = vld [vmem:[%s208 + $0x18] sm:$0xff]
      %v253 = vld [vmem:[%s208 + $0x20] sm:$0xff]
      %v254 = vld [vmem:[%s208 + $0x28] sm:$0xff]
      %v255 = vld [vmem:[%s208 + $0x30] sm:$0xff]
      %v256 = vld [vmem:[%s208 + $0x38] sm:$0xff]
      %v257 = vld [vmem:[%s208 + $0x40] sm:$0xff]
      %v258 = vld [vmem:[%s208 + $0x48] sm:$0xff]
      %v259 = vld [vmem:[%s208 + $0x50] sm:$0xff]
      %v260 = vld [vmem:[%s208 + $0x58] sm:$0xff]
      %v261 = vld [vmem:[%s208 + $0x60] sm:$0xff]
      %v262 = vld [vmem:[%s208 + $0x68] sm:$0xff]
      %v263 = vld [vmem:[%s208 + $0x70] sm:$0xff]
      %v264 = vld [vmem:[%s208 + $0x78] sm:$0xff]
      %v265 = vld [vmem:[%s208 + $0x80] sm:$0xff]
      %v266 = vld [vmem:[%s208 + $0x88] sm:$0xff]
      %s267 = scalar_lea.vmem %s208, 144
      %v268 = vld [vmem:[%s267] sm:$0xff]
      %v269 = vld [vmem:[%s267 + $0x8] sm:$0xff]
      %v270 = vld [vmem:[%s267 + $0x10] sm:$0xff]
      %v271 = vld [vmem:[%s267 + $0x18] sm:$0xff]
      %v272 = vld [vmem:[%s267 + $0x20] sm:$0xff]
      %v273 = vld [vmem:[%s267 + $0x28] sm:$0xff]
      %v274 = vld [vmem:[%s267 + $0x30] sm:$0xff]
      %v275 = vld [vmem:[%s267 + $0x38] sm:$0xff]
      %v276 = vld [vmem:[%s267 + $0x40] sm:$0xff]
      %v277 = vld [vmem:[%s267 + $0x48] sm:$0xff]
      %v278 = vld [vmem:[%s267 + $0x50] sm:$0xff]
      %v279 = vld [vmem:[%s267 + $0x58] sm:$0xff]
      %v280 = vld [vmem:[%s267 + $0x60] sm:$0xff]
      %v281 = vld [vmem:[%s267 + $0x68] sm:$0xff]
      %v282 = vld [vmem:[%s267 + $0x70] sm:$0xff]
      %v283 = vld [vmem:[%s267 + $0x78] sm:$0xff]
      %v284 = vld [vmem:[%s267 + $0x80] sm:$0xff]
      %v285 = vld [vmem:[%s267 + $0x88] sm:$0xff]
      %vm292 = vcmask 1046528
      %v293 = vrot.slane %v243, 1
      %v294 = vrot.slane %v245, 1
      %v295 = vsel %vm292, %v293, %v294
      %v296 = vrot.slane %v244, 1
      %v297 = vrot.slane %v246, 1
      %v298 = vsel %vm292, %v296, %v297
      %v299 = vrot.slane %v247, 1
      %v300 = vsel %vm292, %v294, %v299
      %v301 = vrot.slane %v248, 1
      %v302 = vsel %vm292, %v297, %v301
      %vm305 = vcmask 130048
      %v306 = vsel %vm305, %v298, 0
      %v308 = vsel %vm305, %v302, 0
      %310 = vmatpush.msra.mxu0 %v283
      %311 = vmatpush.msra.mxu0 %v282
      %312 = vmatpush.msra.mxu0 %v281
      %313 = vmatpush.msra.mxu0 %v280
      %314 = vmatpush.msra.mxu0 %v279
      %315 = vmatpush.msra.mxu0 %v278
      %316 = vmatpush.msra.mxu0 %v277
      %317 = vmatpush.msra.mxu0 %v276
      %318 = vmatpush.msra.mxu0 %v275
      %319 = vmatpush.msra.mxu0 %v274
      %320 = vmatpush.msra.mxu0 %v273
      %321 = vmatpush.msra.mxu0 %v272
      %322 = vmatpush.msra.mxu0 %v271
      %323 = vmatpush.msra.mxu0 %v270
      %324 = vmatpush.msra.mxu0 %v269
      %325 = vmatpush.msra.mxu0 %v268
      %326 = vmatmul.f32.gmra.mxu0 %v295
      %v327 = vpop.f32.mrf.mxu0
      %v328 = vadd.f32 0.0, %v327
      %329 = vmatmul.f32.gmra.mxu0 %v300
      %v330 = vpop.f32.mrf.mxu0
      %v331 = vadd.f32 0.0, %v330
      %332 = vdwg.mxu0
      %333 = vmatpush.msra.mxu0 0.0
      %334 = vmatpush.msra.mxu0 0.0
      %335 = vmatpush.msra.mxu0 0.0
      %336 = vmatpush.msra.mxu0 0.0
      %337 = vmatpush.msra.mxu0 0.0
      %338 = vmatpush.msra.mxu0 0.0
      %339 = vmatpush.msra.mxu0 0.0
      %340 = vmatpush.msra.mxu0 0.0
      %341 = vmatpush.msra.mxu0 0.0
      %342 = vmatpush.msra.mxu0 0.0
      %343 = vmatpush.msra.mxu0 0.0
      %344 = vmatpush.msra.mxu0 0.0
      %345 = vmatpush.msra.mxu0 0.0
      %346 = vmatpush.msra.mxu0 0.0
      %347 = vmatpush.msra.mxu0 %v285
      %348 = vmatpush.msra.mxu0 %v284
      %349 = vmatmul.f32.gmra.mxu0 %v306
      %v350 = vpop.f32.mrf.mxu0
      %v351 = vadd.f32 %v328, %v350
      %352 = vmatmul.f32.gmra.mxu0 %v308
      %v353 = vpop.f32.mrf.mxu0
      %v354 = vadd.f32 %v331, %v353
      %355 = vdwg.mxu0
      %v356 = vsel %vm305, %v244, 0
      %v358 = vsel %vm305, %v246, 0
      %360 = vmatpush.msra.mxu0 %v264
      %361 = vmatpush.msra.mxu0 %v263
      %362 = vmatpush.msra.mxu0 %v262
      %363 = vmatpush.msra.mxu0 %v261
      %364 = vmatpush.msra.mxu0 %v260
      %365 = vmatpush.msra.mxu0 %v259
      %366 = vmatpush.msra.mxu0 %v258
      %367 = vmatpush.msra.mxu0 %v257
      %368 = vmatpush.msra.mxu0 %v256
      %369 = vmatpush.msra.mxu0 %v255
      %370 = vmatpush.msra.mxu0 %v254
      %371 = vmatpush.msra.mxu0 %v253
      %372 = vmatpush.msra.mxu0 %v252
      %373 = vmatpush.msra.mxu0 %v251
      %374 = vmatpush.msra.mxu0 %v250
      %375 = vmatpush.msra.mxu0 %v249
      %376 = vmatmul.f32.gmra.mxu0 %v243
      %v377 = vpop.f32.mrf.mxu0
      %v378 = vadd.f32 %v351, %v377
      %379 = vmatmul.f32.gmra.mxu0 %v245
      %v380 = vpop.f32.mrf.mxu0
      %v381 = vadd.f32 %v354, %v380
      %382 = vdwg.mxu0
      %383 = vmatpush.msra.mxu0 0.0
      %384 = vmatpush.msra.mxu0 0.0
      %385 = vmatpush.msra.mxu0 0.0
      %386 = vmatpush.msra.mxu0 0.0
      %387 = vmatpush.msra.mxu0 0.0
      %388 = vmatpush.msra.mxu0 0.0
      %389 = vmatpush.msra.mxu0 0.0
      %390 = vmatpush.msra.mxu0 0.0
      %391 = vmatpush.msra.mxu0 0.0
      %392 = vmatpush.msra.mxu0 0.0
      %393 = vmatpush.msra.mxu0 0.0
      %394 = vmatpush.msra.mxu0 0.0
      %395 = vmatpush.msra.mxu0 0.0
      %396 = vmatpush.msra.mxu0 0.0
      %397 = vmatpush.msra.mxu0 %v266
      %398 = vmatpush.msra.mxu0 %v265
      %399 = vmatmul.f32.gmra.mxu0 %v356
      %v400 = vpop.f32.mrf.mxu0
      %v401 = vadd.f32 %v378, %v400
      %402 = vmatmul.f32.gmra.mxu0 %v358
      %v403 = vpop.f32.mrf.mxu0
      %v404 = vadd.f32 %v381, %v403
      %405 = vdwg.mxu0
      %s406 = scalar_lea.vmem %s208, 288
      %v407 = vld [vmem:[%s406] sm:$0xff]
      %v408 = vld [vmem:[%s406 + $0x8] sm:$0xff]
      %v409 = vld [vmem:[%s406 + $0x10] sm:$0xff]
      %v410 = vld [vmem:[%s406 + $0x18] sm:$0xff]
      %v411 = vld [vmem:[%s406 + $0x20] sm:$0xff]
      %v412 = vld [vmem:[%s406 + $0x28] sm:$0xff]
      %v413 = vld [vmem:[%s406 + $0x30] sm:$0xff]
      %v414 = vld [vmem:[%s406 + $0x38] sm:$0xff]
      %v415 = vld [vmem:[%s406 + $0x40] sm:$0xff]
      %v416 = vld [vmem:[%s406 + $0x48] sm:$0xff]
      %v417 = vld [vmem:[%s406 + $0x50] sm:$0xff]
      %v418 = vld [vmem:[%s406 + $0x58] sm:$0xff]
      %v419 = vld [vmem:[%s406 + $0x60] sm:$0xff]
      %v420 = vld [vmem:[%s406 + $0x68] sm:$0xff]
      %v421 = vld [vmem:[%s406 + $0x70] sm:$0xff]
      %v422 = vld [vmem:[%s406 + $0x78] sm:$0xff]
      %v423 = vld [vmem:[%s406 + $0x80] sm:$0xff]
      %v424 = vld [vmem:[%s406 + $0x88] sm:$0xff]
      %vm425 = vcmask 1045504
      %v426 = vrot.slane %v243, 2
      %v427 = vrot.slane %v245, 2
      %v428 = vsel %vm425, %v426, %v427
      %v429 = vrot.slane %v244, 2
      %v430 = vrot.slane %v246, 2
      %v431 = vsel %vm425, %v429, %v430
      %v432 = vrot.slane %v247, 2
      %v433 = vsel %vm425, %v427, %v432
      %v434 = vrot.slane %v248, 2
      %v435 = vsel %vm425, %v430, %v434
      %v438 = vsel %vm305, %v431, 0
      %v440 = vsel %vm305, %v435, 0
      %442 = vmatpush.msra.mxu0 %v422
      %443 = vmatpush.msra.mxu0 %v421
      %444 = vmatpush.msra.mxu0 %v420
      %445 = vmatpush.msra.mxu0 %v419
      %446 = vmatpush.msra.mxu0 %v418
      %447 = vmatpush.msra.mxu0 %v417
      %448 = vmatpush.msra.mxu0 %v416
      %449 = vmatpush.msra.mxu0 %v415
      %450 = vmatpush.msra.mxu0 %v414
      %451 = vmatpush.msra.mxu0 %v413
      %452 = vmatpush.msra.mxu0 %v412
      %453 = vmatpush.msra.mxu0 %v411
      %454 = vmatpush.msra.mxu0 %v410
      %455 = vmatpush.msra.mxu0 %v409
      %456 = vmatpush.msra.mxu0 %v408
      %457 = vmatpush.msra.mxu0 %v407
      %458 = vmatmul.f32.gmra.mxu0 %v428
      %v459 = vpop.f32.mrf.mxu0
      %v460 = vadd.f32 0.0, %v459
      %461 = vmatmul.f32.gmra.mxu0 %v433
      %v462 = vpop.f32.mrf.mxu0
      %v463 = vadd.f32 0.0, %v462
      %464 = vdwg.mxu0
      %465 = vmatpush.msra.mxu0 0.0
      %466 = vmatpush.msra.mxu0 0.0
      %467 = vmatpush.msra.mxu0 0.0
      %468 = vmatpush.msra.mxu0 0.0
      %469 = vmatpush.msra.mxu0 0.0
      %470 = vmatpush.msra.mxu0 0.0
      %471 = vmatpush.msra.mxu0 0.0
      %472 = vmatpush.msra.mxu0 0.0
      %473 = vmatpush.msra.mxu0 0.0
      %474 = vmatpush.msra.mxu0 0.0
      %475 = vmatpush.msra.mxu0 0.0
      %476 = vmatpush.msra.mxu0 0.0
      %477 = vmatpush.msra.mxu0 0.0
      %478 = vmatpush.msra.mxu0 0.0
      %479 = vmatpush.msra.mxu0 %v424
      %480 = vmatpush.msra.mxu0 %v423
      %481 = vmatmul.f32.gmra.mxu0 %v438
      %v482 = vpop.f32.mrf.mxu0
      %v483 = vadd.f32 %v460, %v482
      %484 = vmatmul.f32.gmra.mxu0 %v440
      %v485 = vpop.f32.mrf.mxu0
      %v486 = vadd.f32 %v463, %v485
      %487 = vdwg.mxu0
      %v488 = vadd.f32 %v401, %v483
      %v489 = vadd.f32 %v404, %v486
      %v490 = vld [vmem:[%s211] sm:$0x1]
      %v492 = vperm.slane %v490, 0
      %v494 = vadd.f32 %v488, %v492
      %v495 = vadd.f32 %v489, %v492
      %vm496 = vcmp.ge.f32.partialorder %v494, 0.0
      %vm497 = vcmp.ge.f32.partialorder %v495, 0.0
      %v498 = vmul.f32 %v494, 0.01
      %v499 = vmul.f32 %v495, 0.01
      %v500 = vsel %vm496, %v494, %v498
      %v501 = vsel %vm497, %v495, %v499
      %v502 = vadd.f32 %v500, %v295
      %v503 = vadd.f32 %v501, %v300
      %vm506 = vcmask 1040384
      %v507 = vrot.slane %v502, 7
      %v508 = vrot.slane %v503, 7
      %v509 = vsel %vm506, %v507, %v508
      %513 = vst [vmem:[#allocation2] sm:$0xfe] %v507
      %514 = vst [vmem:[#allocation2 + $0x10] sm:$0xff] %v509
      %515 = vst [vmem:[#allocation2 + $0x20] sm:$0x1] %v508
      %p516 = scmp.eq.s32.totalorder %s19, 1
      // Predicated region
      $region37: #{np_bayes_conv_superblock_forward.1} parent=31 // pred_check
        %p517 = pneg %p516
      $region38: #{np_bayes_conv_superblock_forward.1} parent=31 // pred_check_branch
        %519 = sbr.rel (%p517) target = $region40
      $region39: #{np_bayes_conv_superblock_forward.1} parent=31 // pred_region
        %520 = vst [vmem:[%s216] sm:$0xff] %v502
        %521 = vst [vmem:[%s216 + $0x8] sm:$0xff] %v503
      $region40: #{np_bayes_conv_superblock_forward.1} parent=31 // pred_fallthru
        _
      %p522 = scmp.lt.s32.totalorder %s18, 1
      %s523 = scalar_select %p522, %s18, 1
      %s524 = smul.addr %s523, 2
      %s525 = smul.addr %s524, 8
      %s526 = scalar_lea.vmem %s3, %s525
      // Predicated region
      $region41: #{np_bayes_conv_superblock_forward.1} parent=31 // pred_check
        %p527 = pneg %p122
      $region42: #{np_bayes_conv_superblock_forward.1} parent=31 // pred_check_branch
        %529 = sbr.rel (%p527) target = $region44
      $region43: #{np_bayes_conv_superblock_forward.1} parent=31 // pred_region
        _
      $region44: #{np_bayes_conv_superblock_forward.1} parent=31 // pred_fallthru
        _
    $region32: #{np_bayes_conv_superblock_forward.1} parent=5 // pred_fallthru
      _
    %p530 = scmp.le.s32.totalorder 2, %s9
    // Predicated region
    $region45: #{np_bayes_conv_superblock_forward.1} parent=5 // pred_check
      %p531 = pneg %p530
    $region46: #{np_bayes_conv_superblock_forward.1} parent=5 // pred_check_branch
      %533 = sbr.rel (%p531) target = $region48
    $region47: #{np_bayes_conv_superblock_forward.1} parent=5 // pred_region
      %s534 = ssub.s32 %s9, 2
      // Predicated region
      $region49: #{np_bayes_conv_superblock_forward.1} parent=47 // pred_check
        %p535 = pneg %p128
      $region50: #{np_bayes_conv_superblock_forward.1} parent=47 // pred_check_branch
        %537 = sbr.rel (%p535) target = $region52
      $region51: #{np_bayes_conv_superblock_forward.1} parent=47 // pred_region
        %p538 = scmp.lt.s32.totalorder %s20, 1
        %s539 = scalar_select %p538, %s20, 1
        %s540 = smul.addr %s539, 2
        %s541 = smul.addr %s540, 8
        %s542 = scalar_lea.vmem %s3, %s541
      $region52: #{np_bayes_conv_superblock_forward.1} parent=47 // pred_fallthru
        _
    $region48: #{np_bayes_conv_superblock_forward.1} parent=5 // pred_fallthru
      _
  $region6: #{np_bayes_conv_superblock_forward.1} parent=0 // loop_footer
    %s13 = sadd.s32 1, %s9
  $region7: #{np_bayes_conv_superblock_forward.1} parent=0 // loop_footer_branch
    %8 = sbr.rel target = $region3
  $region8: #{np_bayes_conv_superblock_forward.1} parent=0 // loop_exit
    _

</llo_original>
